<compile_context>
chip_gen: v6e
topology: v6e:2x2x1
jax: 0.10.0
libtpu: 0.0.40
codegen_flags: <defaults>
</compile_context>

<pallas_src>
import math

import jax
import jax.numpy as jnp
from jax import lax
from jax.experimental import pallas as pl
from jax.experimental.pallas import tpu as pltpu


# Single VMEM budget that is safe on every generation:
# above v5e's 16 MiB scoped default, comfortably below v7x's 64 MiB physical.
_VMEM_LIMIT = 48 * 1024 * 1024


def _round_up(x, m):
    return (x + m - 1) // m * m


# --------------------------------------------------------------------------
# Pallas kernel 1: accumulate sum(X, axis=0) and X^T @ X over row tiles.
# Grid = (core_split, row_tiles); axis 0 is parallel (v7x 2-TC sharding),
# axis 1 is the sequential reduction with init on the first step.
# --------------------------------------------------------------------------
def _stats_kernel(x_ref, sum_ref, xx_ref):
    @pl.when(pl.program_id(1) == 0)
    def _():
        sum_ref[...] = jnp.zeros_like(sum_ref)
        xx_ref[...] = jnp.zeros_like(xx_ref)

    x = x_ref[...].astype(jnp.float32)
    # Column sum runs on the XLU slot; it is free filler under the MXU matmul.
    sum_ref[...] += jnp.sum(x, axis=0, keepdims=True)[None]
    # X^T X without an explicit transpose: contract dim 0 with dim 0 (MXU).
    xx_ref[...] += lax.dot_general(
        x, x, dimension_numbers=(((0,), (0,)), ((), ())),
        preferred_element_type=jnp.float32)[None]


def compute_stats(x2d, *, tile_rows=512, core_splits=2):
    """x2d: (N, block) -> (mean (block,), E[x x^T] (block, block)) in float32."""
    n, blk = x2d.shape

    tile = min(tile_rows, _round_up(n, 8))           # sublane-aligned row tile
    n_tiles = pl.cdiv(n, tile)
    ncores = core_splits if n_tiles >= core_splits else 1
    n_tiles = _round_up(n_tiles, ncores)
    tiles_per_core = n_tiles // ncores
    n_pad = n_tiles * tile

    x_p = jnp.pad(x2d, ((0, n_pad - n), (0, 0))) if n_pad != n else x2d

    cost = pl.CostEstimate(
        flops=2 * n_pad * blk * blk + n_pad * blk,
        transcendentals=0,
        bytes_accessed=x_p.size * x_p.dtype.itemsize
        + 4 * ncores * (blk * blk + blk))

    s, xx = pl.pallas_call(
        _stats_kernel,
        out_shape=(jax.ShapeDtypeStruct((ncores, 1, blk), jnp.float32),
                   jax.ShapeDtypeStruct((ncores, blk, blk), jnp.float32)),
        grid_spec=pltpu.PrefetchScalarGridSpec(
            num_scalar_prefetch=0,
            grid=(ncores, tiles_per_core),
            in_specs=[pl.BlockSpec(
                (tile, blk), lambda c, i: (c * tiles_per_core + i, 0))],
            out_specs=(pl.BlockSpec((1, 1, blk), lambda c, i: (c, 0, 0)),
                       pl.BlockSpec((1, blk, blk), lambda c, i: (c, 0, 0)))),
        compiler_params=pltpu.CompilerParams(
            dimension_semantics=("parallel", "arbitrary"),
            vmem_limit_bytes=_VMEM_LIMIT),
        cost_estimate=cost,
    )(x_p)
    # Zero-padded rows contribute nothing; normalize by the true row count.
    return s.sum(axis=(0, 1)) / n, xx.sum(axis=0) / n


# --------------------------------------------------------------------------
# Pallas kernel 2: y = x @ w_t + b with w_t pre-transposed to (in_f, out_f).
# 3-D grid (M, N, K), f32 accumulator scratch, init/finalize on the K axis.
# --------------------------------------------------------------------------
def _linear_kernel(x_ref, w_ref, b_ref, o_ref, acc_ref):
    k = pl.program_id(2)

    @pl.when(k == 0)
    def _():
        acc_ref[...] = jnp.zeros_like(acc_ref)

    acc_ref[...] += jnp.dot(x_ref[...], w_ref[...],
                            preferred_element_type=jnp.float32)

    @pl.when(k == pl.num_programs(2) - 1)
    def _():
        o_ref[...] = (acc_ref[...] + b_ref[...].astype(jnp.float32)
                      ).astype(o_ref.dtype)


def pallas_linear(x2d, w_t, b, *, out_dtype=None, tm=512, tn=256, tk=512):
    """y = x2d @ w_t + b. Pads M/N/K so tiles are MXU-sized and lane-dense."""
    m, in_f = x2d.shape
    in_f2, out_f = w_t.shape
    assert in_f == in_f2
    out_dtype = out_dtype or x2d.dtype

    # M: large row tiles (multiple of 8 sublanes), padded rows are zeros.
    tm_e = min(tm, _round_up(m, 8))
    m_pad = _round_up(m, tm_e)
    # N: lane-dense (multiple of 128) output tiles -> unmasked vector stores.
    out_f_pad = _round_up(out_f, 128)
    tn_e = tn if out_f_pad % tn == 0 else 128
    # K: multiple of 128; zero padding contributes nothing to the dot.
    in_f_pad = _round_up(in_f, 128)
    if in_f_pad % tk == 0:
        tk_e = tk
    elif in_f_pad % 256 == 0:
        tk_e = 256
    else:
        tk_e = 128

    x_p = (jnp.pad(x2d, ((0, m_pad - m), (0, in_f_pad - in_f)))
           if (m_pad != m or in_f_pad != in_f) else x2d)
    w_p = (jnp.pad(w_t, ((0, in_f_pad - in_f), (0, out_f_pad - out_f)))
           if (in_f_pad != in_f or out_f_pad != out_f) else w_t)
    b_p = jnp.pad(b, (0, out_f_pad - out_f)).reshape(1, out_f_pad)

    grid = (m_pad // tm_e, out_f_pad // tn_e, in_f_pad // tk_e)

    cost = pl.CostEstimate(
        flops=2 * m_pad * out_f_pad * in_f_pad,
        transcendentals=0,
        bytes_accessed=(x_p.size * x_p.dtype.itemsize
                        + w_p.size * w_p.dtype.itemsize
                        + m_pad * out_f_pad * jnp.dtype(out_dtype).itemsize))

    y = pl.pallas_call(
        _linear_kernel,
        out_shape=jax.ShapeDtypeStruct((m_pad, out_f_pad), out_dtype),
        grid_spec=pltpu.PrefetchScalarGridSpec(
            num_scalar_prefetch=0,
            grid=grid,
            in_specs=[pl.BlockSpec((tm_e, tk_e), lambda i, j, k: (i, k)),
                      pl.BlockSpec((tk_e, tn_e), lambda i, j, k: (k, j)),
                      pl.BlockSpec((1, tn_e), lambda i, j, k: (0, j))],
            out_specs=pl.BlockSpec((tm_e, tn_e), lambda i, j, k: (i, j)),
            scratch_shapes=[pltpu.VMEM((tm_e, tn_e), jnp.float32)]),
        compiler_params=pltpu.CompilerParams(
            dimension_semantics=("parallel", "parallel", "arbitrary"),
            vmem_limit_bytes=_VMEM_LIMIT),
        cost_estimate=cost,
    )(x_p, w_p, b_p)
    return y[:m, :out_f]


# --------------------------------------------------------------------------
# Small glue: Newton-Schulz inverse matrix square root ('inverse_newton'),
# forced to float32 for stability regardless of the activation dtype.
# --------------------------------------------------------------------------
def isqrt_newton_schulz(A, num_iters):
    A = A.astype(jnp.float32)
    dim = A.shape[0]
    normA = jnp.linalg.norm(A)          # Frobenius norm, matches torch .norm()
    I = jnp.eye(dim, dtype=jnp.float32)
    Y = A / normA
    Z = jnp.eye(dim, dtype=jnp.float32)
    for _ in range(num_iters):
        T = (3.0 * I - Y) / 2.0
        Y = (T @ T) @ Y
        Z = Z @ T
    return Z / jnp.sqrt(normA)


# --------------------------------------------------------------------------
# Delinear forward (norm_type='none', sync=False)
# --------------------------------------------------------------------------
def delinear_forward(x, weight, bias, running_mean, running_cov_isqrt,
                     *, block, eps=1e-5, n_iter=5, momentum=0.1,
                     training=True, matmul_dtype=None):
    out_f, in_f = weight.shape
    out_dtype = x.dtype
    # On v6e/v7x pass matmul_dtype=jnp.bfloat16 for ~3x MXU throughput
    # (accumulation stays f32 inside the kernel); default keeps exact dtype.
    matmul_dtype = matmul_dtype or x.dtype

    if training:
        X = x.reshape(-1, block)
        x_mean, xx_mean = compute_stats(X)                         # Pallas, f32
        cov = (xx_mean - jnp.outer(x_mean, x_mean)
               + eps * jnp.eye(block, dtype=jnp.float32))
        cov_isqrt = isqrt_newton_schulz(cov, n_iter)               # f32
        new_running_mean = (running_mean * (1 - momentum)
                            + x_mean.astype(running_mean.dtype) * momentum)
        new_running_cov_isqrt = (
            running_cov_isqrt * (1 - momentum)
            + cov_isqrt.astype(running_cov_isqrt.dtype) * momentum)
    else:
        x_mean = running_mean.astype(jnp.float32)
        cov_isqrt = running_cov_isqrt.astype(jnp.float32)
        new_running_mean, new_running_cov_isqrt = running_mean, running_cov_isqrt

    # Weight whitening (small parameter prep) in f32, plain JAX.
    w_flat = weight.astype(jnp.float32).reshape(-1, block) @ cov_isqrt
    b_corr = (w_flat @ x_mean).reshape(out_f, -1).sum(axis=1)
    b = (bias.astype(jnp.float32) - b_corr) if bias is not None else -b_corr
    # Pre-transpose once here so the kernel never pays a per-step XLU transpose.
    w_t = w_flat.reshape(out_f, in_f).T                            # (in_f, out_f)

    y2d = pallas_linear(x.reshape(-1, in_f).astype(matmul_dtype),
                        w_t.astype(matmul_dtype), b,
                        out_dtype=out_dtype)                       # Pallas
    y = y2d.reshape(x.shape[:-1] + (out_f,))
    return y, new_running_mean, new_running_cov_isqrt


# --------------------------------------------------------------------------
# Pure-JAX reference (mirrors the PyTorch forward, training branch)
# --------------------------------------------------------------------------
def ref_forward(x, weight, bias, *, block, eps=1e-5, n_iter=5):
    X = x.reshape(-1, block)
    N = X.shape[0]
    X_mean = X.mean(0)
    XX_mean = X.T @ X / N
    cov = (XX_mean - X_mean[:, None] @ X_mean[None, :]
           + eps * jnp.eye(block, dtype=jnp.float32))
    cov_isqrt = isqrt_newton_schulz(cov, n_iter)
    w = weight.reshape(-1, block) @ cov_isqrt
    b = bias - (w @ X_mean[:, None]).reshape(weight.shape[0], -1).sum(1)
    w = w.reshape(weight.shape)
    return x @ w.T + b


def _run_case(key, B, S, in_features, out_features, eps, n_iter, momentum,
              atol):
    block = min(512, in_features)     # block > in_features -> block = in_features
    k1, k2, k3 = jax.random.split(key, 3)

    # kaiming_uniform_(a=sqrt(5)) on (out, in) -> U(-1/sqrt(fan_in), 1/sqrt(fan_in))
    bound = 1.0 / math.sqrt(in_features)
    weight = jax.random.uniform(k1, (out_features, in_features), jnp.float32,
                                -bound, bound)
    bias = jax.random.uniform(k2, (out_features,), jnp.float32, -bound, bound)
    running_mean = jnp.zeros((block,), jnp.float32)
    running_cov_isqrt = jnp.eye(block, dtype=jnp.float32)
    x = jax.random.normal(k3, (B, S, in_features), dtype=jnp.float32)

    y, _, _ = delinear_forward(
        x, weight, bias, running_mean, running_cov_isqrt,
        block=block, eps=eps, n_iter=n_iter, momentum=momentum, training=True)
    y = jax.block_until_ready(y)

    y_ref = ref_forward(x, weight, bias, block=block, eps=eps, n_iter=n_iter)
    assert y.shape == (B, S, out_features)
    err = float(jnp.max(jnp.abs(y - y_ref)))
    assert jnp.allclose(y, y_ref, atol=atol, rtol=atol), err


if __name__ == "__main__":
    eps, n_iter, momentum = 1e-5, 5, 0.1
    key = jax.random.PRNGKey(0)
    k_a, k_b = jax.random.split(key)

    # Small case (in=32, out=16, block=32): exercises padding of the lane
    # dims (out_f 16 -> 128, in_f 32 -> 128) and single-tile grids.
    _run_case(k_a, B=4, S=8, in_features=32, out_features=16,
              eps=eps, n_iter=n_iter, momentum=momentum, atol=1e-4)

    # Larger case (in=256, out=192, block=256, 1024 rows): exercises the
    # multi-tile M grid, K/N tiling, and the 2-way core split of the stats
    # reduction (two partial (blk,blk) accumulators summed in JAX).
    _run_case(k_b, B=8, S=128, in_features=256, out_features=192,
              eps=eps, n_iter=n_iter, momentum=momentum, atol=2e-3)

    # TODO(synk): distributed sync path (sync=True / all_gather of X_mean,
    # XX_mean) has no single-device Pallas equivalent and is omitted.
    print("KERNEL_OK")
</pallas_src>

<mosaic_0001>
module attributes {stable_mosaic.version = 11 : i64} {
  func.func @_stats_kernel(%arg0: i32, %arg1: i32, %arg2: memref<32x32xf32, #tpu.memory_space<vmem>>, %arg3: memref<1x1x32xf32, #tpu.memory_space<vmem>>, %arg4: memref<1x32x32xf32, #tpu.memory_space<vmem>>) attributes {dimension_semantics = [#tpu.dimension_semantics<parallel>, #tpu.dimension_semantics<arbitrary>], iteration_bounds = array<i64: 1, 1>, scalar_prefetch = 0 : i64, scratch_operands = 0 : i64, tpu.core_type = #tpu.core_type<tc>, window_params = [{transform_indices = @transform_0, window_bounds = array<i64: 32, 32>}, {transform_indices = @transform_1, window_bounds = array<i64: 1, 1, 32>}, {transform_indices = @transform_2, window_bounds = array<i64: 1, 32, 32>}]} {
    %c0_i32 = arith.constant 0 : i32
    %0 = arith.cmpi eq, %arg1, %c0_i32 : i32
    %1 = arith.extui %0 : i1 to i32
    %c0_i32_0 = arith.constant 0 : i32
    %2 = arith.cmpi ne, %1, %c0_i32_0 : i32
    scf.if %2 {
      %cst_15 = arith.constant 0.000000e+00 : f32
      %15 = vector.broadcast %cst_15 : f32 to vector<1x1x32xf32>
      %c0_16 = arith.constant 0 : index
      %c0_17 = arith.constant 0 : index
      %c0_18 = arith.constant 0 : index
      %16 = vector.load %arg3[%c0_16, %c0_17, %c0_18] : memref<1x1x32xf32, #tpu.memory_space<vmem>>, vector<1x1x32xf32>
      tpu.vector_store %arg3[%c0_16, %c0_17, %c0_18], %15 {strides = array<i32>} : memref<1x1x32xf32, #tpu.memory_space<vmem>>, vector<1x1x32xf32>,
      %cst_19 = arith.constant 0.000000e+00 : f32
      %17 = vector.broadcast %cst_19 : f32 to vector<1x32x32xf32>
      %c0_20 = arith.constant 0 : index
      %c0_21 = arith.constant 0 : index
      %c0_22 = arith.constant 0 : index
      %18 = vector.load %arg4[%c0_20, %c0_21, %c0_22] : memref<1x32x32xf32, #tpu.memory_space<vmem>>, vector<1x32x32xf32>
      tpu.vector_store %arg4[%c0_20, %c0_21, %c0_22], %17 {strides = array<i32>} : memref<1x32x32xf32, #tpu.memory_space<vmem>>, vector<1x32x32xf32>,
    } else {
    }
    %c0 = arith.constant 0 : index
    %c0_1 = arith.constant 0 : index
    %3 = vector.load %arg2[%c0, %c0_1] : memref<32x32xf32, #tpu.memory_space<vmem>>, vector<32x32xf32>
    %c0_2 = arith.constant 0 : index
    %c0_3 = arith.constant 0 : index
    %c0_4 = arith.constant 0 : index
    %4 = vector.load %arg3[%c0_2, %c0_3, %c0_4] : memref<1x1x32xf32, #tpu.memory_space<vmem>>, vector<1x1x32xf32>
    %cst = arith.constant dense<0.000000e+00> : vector<32xf32>
    %5 = vector.multi_reduction <add>, %3, %cst [0] : vector<32x32xf32> to vector<32xf32>
    %6 = vector.shape_cast %5 : vector<32xf32> to vector<1x32xf32>
    %7 = vector.shape_cast %6 : vector<1x32xf32> to vector<1x1x32xf32>
    %8 = arith.addf %4, %7 : vector<1x1x32xf32>
    %c0_5 = arith.constant 0 : index
    %c0_6 = arith.constant 0 : index
    %c0_7 = arith.constant 0 : index
    %9 = vector.load %arg3[%c0_5, %c0_6, %c0_7] : memref<1x1x32xf32, #tpu.memory_space<vmem>>, vector<1x1x32xf32>
    tpu.vector_store %arg3[%c0_5, %c0_6, %c0_7], %8 {strides = array<i32>} : memref<1x1x32xf32, #tpu.memory_space<vmem>>, vector<1x1x32xf32>,
    %c0_8 = arith.constant 0 : index
    %c0_9 = arith.constant 0 : index
    %c0_10 = arith.constant 0 : index
    %10 = vector.load %arg4[%c0_8, %c0_9, %c0_10] : memref<1x32x32xf32, #tpu.memory_space<vmem>>, vector<1x32x32xf32>
    %cst_11 = arith.constant dense<0.000000e+00> : vector<32x32xf32>
    %11 = tpu.matmul %3, %3, %cst_11 {dimension_numbers = #tpu.dot_dimension_numbers<[0], [0], [1], [1], [0, 1, 1, 1], [], []>} : vector<32x32xf32>, vector<32x32xf32>, vector<32x32xf32> -> vector<32x32xf32>
    %12 = vector.shape_cast %11 : vector<32x32xf32> to vector<1x32x32xf32>
    %13 = arith.addf %10, %12 : vector<1x32x32xf32>
    %c0_12 = arith.constant 0 : index
    %c0_13 = arith.constant 0 : index
    %c0_14 = arith.constant 0 : index
    %14 = vector.load %arg4[%c0_12, %c0_13, %c0_14] : memref<1x32x32xf32, #tpu.memory_space<vmem>>, vector<1x32x32xf32>
    tpu.vector_store %arg4[%c0_12, %c0_13, %c0_14], %13 {strides = array<i32>} : memref<1x32x32xf32, #tpu.memory_space<vmem>>, vector<1x32x32xf32>,
    return
  }
  func.func @transform_0(%arg0: i32, %arg1: i32) -> (i32, i32) {
    %c1_i32 = arith.constant 1 : i32
    %0 = arith.muli %arg0, %c1_i32 : i32
    %1 = arith.addi %0, %arg1 : i32
    %c0_i32 = arith.constant 0 : i32
    %c0_i32_0 = arith.constant 0 : i32
    return %1, %c0_i32 : i32, i32
  }
  func.func @transform_1(%arg0: i32, %arg1: i32) -> (i32, i32, i32) {
    %c0_i32 = arith.constant 0 : i32
    %c0_i32_0 = arith.constant 0 : i32
    %c0_i32_1 = arith.constant 0 : i32
    return %arg0, %c0_i32, %c0_i32_0 : i32, i32, i32
  }
  func.func @transform_2(%arg0: i32, %arg1: i32) -> (i32, i32, i32) {
    %c0_i32 = arith.constant 0 : i32
    %c0_i32_0 = arith.constant 0 : i32
    %c0_i32_1 = arith.constant 0 : i32
    return %arg0, %c0_i32, %c0_i32_0 : i32, i32, i32
  }
}

</mosaic_0001>

<llo_original>
// kernel: tpu_custom_call.1
$region0: #{tpu_custom_call.1}
  #allocation0 [shape = 'u32[]', space=smem, size = 0x4, offset = 0x4, fixed_abs, tag = 'smem constant byte address 0x4 - core index']
  #allocation1 [shape = 'u32[144,128]{1,0:T(1,128)}', space=vmem, size = 0x12000, scoped, tag = 'internal scratch']
  %s0 = inlined_call_operand.hbm [shape: f32[32,32], index: 0, kind: input, shape index: {}]
  %s1 = inlined_call_operand.hbm [shape: f32[1,1,32], index: 1, kind: output, shape index: {0}]
  %s2 = inlined_call_operand.hbm [shape: f32[1,32,32], index: 2, kind: output, shape index: {1}]
  %3 = xla_tuple %s1, %s2
  %s4 = sld [smem:[#allocation0]]
  $region30: #{tpu_custom_call.1} parent=0
    _
  %s6 = ssub.s32 1, %s4
  %s7 = scalar_select 0, %s6, %s4
  $region1: #{tpu_custom_call.1} parent=0
    #allocation2 [shape = 'u8[16384]{0}', space=vmem, size = 0x4000, scoped, tag = 'input window, operand 0, single buffered']
    #allocation3 [shape = 's32[1]{0}', space=sflag, size = 0x4, scoped, tag = 'scoped memory for tpu_custom_call.1']
    #allocation4 [shape = 's32[1]{0}', space=sflag, size = 0x4, scoped, tag = 'scoped memory for tpu_custom_call.1']
    #allocation5 [shape = 'u8[512]{0}', space=vmem, size = 0x400, scoped, tag = 'output window, operand 0, single buffered']
    #allocation6 [shape = 'u8[16384]{0}', space=vmem, size = 0x4000, scoped, tag = 'output window, operand 1, single buffered']
    #allocation7 [shape = 's32[1]{0}', space=sflag, size = 0x4, scoped, tag = 'scoped memory for tpu_custom_call.1']
    %8 = vsyncpa [#allocation3], 0
    %9 = vsyncpa [#allocation4], 0
    %10 = vsyncpa [#allocation7], 0
    // Predicated region
    $region2: #{tpu_custom_call.1} parent=1 // pred_check
      _
    $region3: #{tpu_custom_call.1} parent=1 // pred_check_branch
      %12 = sbr.rel (0) target = $region5
    $region4: #{tpu_custom_call.1} parent=1 // pred_region
      %s13 = sadd.s32 0, 0
      %s14 = smul.u32 4, %s13
      %s16 = ssub.s32 512, 512
      %17 = vsyncadd [#allocation3], %s16
      %s18 = smul.addr %s14, 128
      %s19 = scalar_lea.hbm %s0, %s18
      %s20 = sshll.u32 [#allocation2], 4
      %s21 = int_to_ptr.vmem [resolvable:$true] %s20
      %26 = dma.hbm_to_vmem [thread:$0]  %s19, 512, %s21, [#allocation3], 128, 128, 8
    $region5: #{tpu_custom_call.1} parent=1 // pred_fallthru
      _
    // Predicated region
    $region6: #{tpu_custom_call.1} parent=1 // pred_check
      _
    $region7: #{tpu_custom_call.1} parent=1 // pred_check_branch
      %28 = sbr.rel (0) target = $region9
    $region8: #{tpu_custom_call.1} parent=1 // pred_region
      %29 = dma.done [#allocation3], 512
    $region9: #{tpu_custom_call.1} parent=1 // pred_fallthru
      _
    %s30 = sadd.s32 0, 0
    %s31 = smul.u32 4, %s30
    %p32 = scmp.eq.s32.totalorder 0, 0
    // Predicated region
    $region10: #{tpu_custom_call.1} parent=1 // pred_check
      %p33 = pneg %p32
    $region11: #{tpu_custom_call.1} parent=1 // pred_check_branch
      %35 = sbr.rel (%p33) target = $region13
    $region12: #{tpu_custom_call.1} parent=1 // pred_region
      %vm36 = vcmask 253952
      %37 = vst.msk [vmem:[#allocation5] sm:$0x1] %vm36, 0.0
      %vm38 = vcmask 261120
      %39 = vst.msk [vmem:[#allocation6] sm:$0xff] %vm38, 0.0
      %40 = vst.msk [vmem:[#allocation6 + $0x8] sm:$0xff] %vm38, 0.0
      %41 = vst.msk [vmem:[#allocation6 + $0x10] sm:$0xff] %vm38, 0.0
      %42 = vst.msk [vmem:[#allocation6 + $0x18] sm:$0xff] %vm38, 0.0
    $region13: #{tpu_custom_call.1} parent=1 // pred_fallthru
      _
    %v43 = vld [vmem:[#allocation2] sm:$0xff]
    %v44 = vld [vmem:[#allocation2 + $0x8] sm:$0xff]
    %v45 = vld [vmem:[#allocation2 + $0x10] sm:$0xff]
    %v46 = vld [vmem:[#allocation2 + $0x18] sm:$0xff]
    %v47 = vld [vmem:[#allocation5] sm:$0x1]
    %vm48 = vcmask 261120
    %v49 = vsel %vm48, %v43, 0.0
    %v50 = vsel %vm48, %v44, 0.0
    %v51 = vadd.f32 %v49, %v50
    %v52 = vsel %vm48, %v45, 0.0
    %v53 = vadd.f32 %v51, %v52
    %v54 = vsel %vm48, %v46, 0.0
    %v55 = vadd.f32 %v53, %v54
    %v56 = vrot.slane %v55, 4
    %v57 = vadd.f32 %v55, %v56
    %v58 = vrot.slane %v57, 2
    %v59 = vadd.f32 %v57, %v58
    %v60 = vrot.slane %v59, 1
    %v61 = vadd.f32 %v59, %v60
    %v62 = vadd.f32 %v47, %v61
    %vm63 = vcmask 253952
    %64 = vst.msk [vmem:[#allocation5] sm:$0x1] %vm63, %v62
    %v65 = vld [vmem:[#allocation6] sm:$0xff]
    %v66 = vld [vmem:[#allocation6 + $0x8] sm:$0xff]
    %v67 = vld [vmem:[#allocation6 + $0x10] sm:$0xff]
    %v68 = vld [vmem:[#allocation6 + $0x18] sm:$0xff]
    %69 = vxpose.xlu0.b32.start [1/16] %v43, 128
    %70 = vxpose.xlu0.b32.cont [2/16] %v44, 128
    %71 = vxpose.xlu0.b32.cont [3/16] %v45, 128
    %72 = vxpose.xlu0.b32.cont [4/16] %v46, 128
    %73 = vxpose.xlu0.b32.cont [5/16] 0.0, 128
    %74 = vxpose.xlu0.b32.cont [6/16] 0.0, 128
    %75 = vxpose.xlu0.b32.cont [7/16] 0.0, 128
    %76 = vxpose.xlu0.b32.cont [8/16] 0.0, 128
    %77 = vxpose.xlu0.b32.cont [9/16] 0.0, 128
    %78 = vxpose.xlu0.b32.cont [10/16] 0.0, 128
    %79 = vxpose.xlu0.b32.cont [11/16] 0.0, 128
    %80 = vxpose.xlu0.b32.cont [12/16] 0.0, 128
    %81 = vxpose.xlu0.b32.cont [13/16] 0.0, 128
    %82 = vxpose.xlu0.b32.cont [14/16] 0.0, 128
    %83 = vxpose.xlu0.b32.cont [15/16] 0.0, 128
    %84 = vxpose.xlu0.b32.end [16/16] 0.0, 128
    %v85 = vpop.trf.xlu0
    %v86 = vpop.trf.xlu0
    %v87 = vpop.trf.xlu0
    %v88 = vpop.trf.xlu0
    %v89 = vpop.trf.xlu0
    %v90 = vpop.trf.xlu0
    %v91 = vpop.trf.xlu0
    %v92 = vpop.trf.xlu0
    %v93 = vpop.trf.xlu0
    %v94 = vpop.trf.xlu0
    %v95 = vpop.trf.xlu0
    %v96 = vpop.trf.xlu0
    %v97 = vpop.trf.xlu0
    %v98 = vpop.trf.xlu0
    %v99 = vpop.trf.xlu0
    %v100 = vpop.trf.xlu0
    %v102 = vsel %vm48, %v85, 0
    %v105 = vsel %vm48, %v86, 0
    %v108 = vsel %vm48, %v87, 0
    %v111 = vsel %vm48, %v88, 0
    %113 = vmatprep.subr.mxu0 0.0
    %114 = vmatpush1.msra.mxu0 0.0
    %115 = vmatprep.subr.mxu0 0.0
    %116 = vmatpush1.msra.mxu0 0.0
    %117 = vmatprep.subr.mxu0 0.0
    %118 = vmatpush1.msra.mxu0 0.0
    %119 = vmatprep.subr.mxu0 0.0
    %120 = vmatpush1.msra.mxu0 0.0
    %121 = vmatprep.subr.mxu0 0.0
    %122 = vmatpush1.msra.mxu0 0.0
    %123 = vmatprep.subr.mxu0 0.0
    %124 = vmatpush1.msra.mxu0 0.0
    %125 = vmatprep.subr.mxu0 0.0
    %126 = vmatpush1.msra.mxu0 0.0
    %127 = vmatprep.subr.mxu0 0.0
    %128 = vmatpush1.msra.mxu0 0.0
    %129 = vmatprep.subr.mxu0 0.0
    %130 = vmatpush1.msra.mxu0 0.0
    %131 = vmatprep.subr.mxu0 0.0
    %132 = vmatpush1.msra.mxu0 0.0
    %133 = vmatprep.subr.mxu0 0.0
    %134 = vmatpush1.msra.mxu0 0.0
    %135 = vmatprep.subr.mxu0 0.0
    %136 = vmatpush1.msra.mxu0 0.0
    %137 = vmatprep.subr.mxu0 0.0
    %138 = vmatpush1.msra.mxu0 %v46
    %139 = vmatprep.subr.mxu0 0.0
    %140 = vmatpush1.msra.mxu0 %v45
    %141 = vmatprep.subr.mxu0 0.0
    %142 = vmatpush1.msra.mxu0 %v44
    %143 = vmatprep.subr.mxu0 0.0
    %144 = vmatpush1.msra.mxu0 %v43
    %145 = vmatprep.subr.mxu0 0.0
    %146 = vmatpush2.msra.mxu0 0.0
    %147 = vmatprep.subr.mxu0 0.0
    %148 = vmatpush2.msra.mxu0 0.0
    %149 = vmatprep.subr.mxu0 0.0
    %150 = vmatpush2.msra.mxu0 0.0
    %151 = vmatprep.subr.mxu0 0.0
    %152 = vmatpush2.msra.mxu0 0.0
    %153 = vmatprep.subr.mxu0 0.0
    %154 = vmatpush2.msra.mxu0 0.0
    %155 = vmatprep.subr.mxu0 0.0
    %156 = vmatpush2.msra.mxu0 0.0
    %157 = vmatprep.subr.mxu0 0.0
    %158 = vmatpush2.msra.mxu0 0.0
    %159 = vmatprep.subr.mxu0 0.0
    %160 = vmatpush2.msra.mxu0 0.0
    %161 = vmatprep.subr.mxu0 0.0
    %162 = vmatpush2.msra.mxu0 0.0
    %163 = vmatprep.subr.mxu0 0.0
    %164 = vmatpush2.msra.mxu0 0.0
    %165 = vmatprep.subr.mxu0 0.0
    %166 = vmatpush2.msra.mxu0 0.0
    %167 = vmatprep.subr.mxu0 0.0
    %168 = vmatpush2.msra.mxu0 0.0
    %169 = vmatprep.subr.mxu0 0.0
    %170 = vmatpush2.msra.mxu0 0.0
    %171 = vmatprep.subr.mxu0 0.0
    %172 = vmatpush2.msra.mxu0 0.0
    %173 = vmatprep.subr.mxu0 0.0
    %174 = vmatpush2.msra.mxu0 0.0
    %175 = vmatprep.subr.mxu0 0.0
    %176 = vmatpush2.msra.mxu0 0.0
    %177 = vmatprep.mubr.f32.mxu0 0.0
    %178 = vmatmul.mubr.f32.gmra.mxu0 %v102
    %v179 = vpop.f32.mrf.mxu0
    %v180 = vadd.f32 0.0, %v179
    %v181 = vpop.f32.mrf.mxu0
    %182 = vmatprep.mubr.f32.mxu0 0.0
    %183 = vmatmul.mubr.f32.gmra.mxu0 %v105
    %v184 = vpop.f32.mrf.mxu0
    %v185 = vadd.f32 0.0, %v184
    %v186 = vpop.f32.mrf.mxu0
    %187 = vmatprep.mubr.f32.mxu0 0.0
    %188 = vmatmul.mubr.f32.gmra.mxu0 %v108
    %v189 = vpop.f32.mrf.mxu0
    %v190 = vadd.f32 0.0, %v189
    %v191 = vpop.f32.mrf.mxu0
    %192 = vmatprep.mubr.f32.mxu0 0.0
    %193 = vmatmul.mubr.f32.gmra.mxu0 %v111
    %v194 = vpop.f32.mrf.mxu0
    %v195 = vadd.f32 0.0, %v194
    %v196 = vpop.f32.mrf.mxu0
    %197 = vdwg.mxu0
    %v198 = vadd.f32 %v65, %v180
    %v199 = vadd.f32 %v66, %v185
    %v200 = vadd.f32 %v67, %v190
    %v201 = vadd.f32 %v68, %v195
    %202 = vst.msk [vmem:[#allocation6] sm:$0xff] %vm48, %v198
    %203 = vst.msk [vmem:[#allocation6 + $0x8] sm:$0xff] %vm48, %v199
    %204 = vst.msk [vmem:[#allocation6 + $0x10] sm:$0xff] %vm48, %v200
    %205 = vst.msk [vmem:[#allocation6 + $0x18] sm:$0xff] %vm48, %v201
    // Predicated region
    $region14: #{tpu_custom_call.1} parent=1 // pred_check
      _
    $region15: #{tpu_custom_call.1} parent=1 // pred_check_branch
      %207 = sbr.rel (0) target = $region17
    $region16: #{tpu_custom_call.1} parent=1 // pred_region
      %s209 = ssub.s32 16, 16
      %210 = vsyncadd [#allocation4], %s209
      %s212 = sshll.u32 [#allocation5], 4
      %s213 = int_to_ptr.vmem [resolvable:$true] %s212
      %215 = dma.vmem_to_hbm [thread:$0]  %s213, 16, %s1, [#allocation4]
    $region17: #{tpu_custom_call.1} parent=1 // pred_fallthru
      _
    // Predicated region
    $region18: #{tpu_custom_call.1} parent=1 // pred_check
      _
    $region19: #{tpu_custom_call.1} parent=1 // pred_check_branch
      %217 = sbr.rel (0) target = $region21
    $region20: #{tpu_custom_call.1} parent=1 // pred_region
      %s219 = ssub.s32 512, 512
      %220 = vsyncadd [#allocation7], %s219
      %s221 = sshll.u32 [#allocation6], 4
      %s222 = int_to_ptr.vmem [resolvable:$true] %s221
      %227 = dma.vmem_to_hbm [thread:$0]  %s222, 512, %s2, [#allocation7], 128, 128, 8
    $region21: #{tpu_custom_call.1} parent=1 // pred_fallthru
      _
    // Predicated region
    $region22: #{tpu_custom_call.1} parent=1 // pred_check
      _
    $region23: #{tpu_custom_call.1} parent=1 // pred_check_branch
      %229 = sbr.rel (0) target = $region25
    $region24: #{tpu_custom_call.1} parent=1 // pred_region
      %230 = dma.done [#allocation4], 16
    $region25: #{tpu_custom_call.1} parent=1 // pred_fallthru
      _
    // Predicated region
    $region26: #{tpu_custom_call.1} parent=1 // pred_check
      _
    $region27: #{tpu_custom_call.1} parent=1 // pred_check_branch
      %232 = sbr.rel (0) target = $region29
    $region28: #{tpu_custom_call.1} parent=1 // pred_region
      %233 = dma.done [#allocation7], 512
    $region29: #{tpu_custom_call.1} parent=1 // pred_fallthru
      _
    %234 = vsyncpa [#allocation3], 1
    %235 = vsyncpa [#allocation4], 1
    %236 = vsyncpa [#allocation7], 1

</llo_original>
